<compile_context>
chip_gen: v7x
topology: tpu7x:2x2x1
jax: 0.10.0
libtpu: 0.0.40
codegen_flags: <defaults>
</compile_context>

<pallas_src>
import jax
import jax.numpy as jnp
from jax.experimental import pallas as pl
from jax.experimental.pallas import tpu as pltpu

RAW_DIM = 12 + 4  # CameraEmbedder(raw_dim=12 + 4, embed_dim=camera_embed_dim)


def _round_up(x: int, m: int) -> int:
    return ((x + m - 1) // m) * m


def _choose_block_m(n: int, max_tile: int = 256) -> int:
    """Multiple-of-8 row tile minimizing padding waste vs per-grid-step overhead."""
    if n <= max_tile:
        return _round_up(max(n, 1), 8)
    best_bm, best_cost = 8, None
    for bm in range(8, max_tile + 1, 8):
        steps = -(-n // bm)
        waste = steps * bm - n
        # ~0.35 us per grid step ~ a handful of padded rows of work; weight it as 16 rows.
        cost = waste + 16 * steps
        if best_cost is None or cost < best_cost:
            best_cost, best_bm = cost, bm
    return best_bm


def _silu_f32(x):
    # SiLU == x * sigmoid(x). exp -> EUP, reciprocal -> EUP (approx, free slot), mul -> VPU.
    return x * pl.reciprocal(1.0 + jnp.exp(-x), approx=True)


def _camera_embedder_kernel(x_ref, w1_ref, b1_ref, w2_ref, b2_ref, o_ref):
    """Fused MLP tile: o = SiLU(x @ W1 + b1) @ W2[:, col_tile] + b2[col_tile].

    x_ref:  (TM, RAW_DIM) f32   | w1_ref: (RAW_DIM, D) f32 | b1_ref: (1, D) f32
    w2_ref: (D, TN) bf16        | b2_ref: (1, TN) f32      | o_ref:  (TM, TN)
    """
    # Layer 1 in f32 (K = raw_dim = 16: negligible FLOPs, preserves camera-pose precision).
    h = jnp.dot(x_ref[...], w1_ref[...], preferred_element_type=jnp.float32)
    h = _silu_f32(h + b1_ref[...])
    # Layer 2 (D x TN — the dominant matmul): bf16 MXU operands, f32 accumulation.
    y = jnp.dot(h.astype(w2_ref.dtype), w2_ref[...], preferred_element_type=jnp.float32)
    y = y + b2_ref[...]
    o_ref[...] = y.astype(o_ref.dtype)


def camera_embedder_pallas(camera, w1_f32, b1_f32, w2_bf16, b2_f32, *,
                           tm: int = 256, tn: int | None = None,
                           small_n_threshold: int = 64):
    """camera: (N, raw_dim) -> (N, D) embeddings in camera.dtype.

    Parameters must be pre-converted (once, outside the forward pass):
      w1_f32: (raw_dim, D) f32, b1_f32: (1, D) f32, w2_bf16: (D, D) bf16, b2_f32: (1, D) f32.
    """
    n, raw_dim = camera.shape
    d = w1_f32.shape[1]
    assert w1_f32.shape == (raw_dim, d) and w2_bf16.shape == (d, d)
    assert b1_f32.shape == (1, d) and b2_f32.shape == (1, d)
    assert d % 128 == 0, "embed_dim should be lane-dense (multiple of 128)"

    out_dtype = camera.dtype

    # Small-N fast path: at the production call site (N ~ batch, e.g. 2) a kernel launch
    # is pure overhead for ~0.03 MFLOP; let XLA fuse the two tiny GEMMs instead.
    if n < small_n_threshold:
        x32 = camera.astype(jnp.float32)
        h = x32 @ w1_f32 + b1_f32
        h = h * jax.nn.sigmoid(h)
        y = jnp.dot(h.astype(w2_bf16.dtype), w2_bf16,
                    preferred_element_type=jnp.float32) + b2_f32
        return y.astype(out_dtype)

    # Adaptive row tile: minimize padded rows (was ~50% waste at N=515 with fixed 256).
    block_m = _choose_block_m(n, tm)
    n_pad = _round_up(n, block_m)
    if n_pad != n:
        camera = jnp.pad(camera, ((0, n_pad - n), (0, 0)))
    x_f32 = camera.astype(jnp.float32)

    # Column tile over D: second "parallel" grid axis (keeps both v7x TensorCores busy,
    # bounds resident W2 slab). Layer 1 recomputed per column tile (K=16, free).
    if tn is None:
        tn = d if d <= 256 else (256 if d % 256 == 0 else 128)
    assert d % tn == 0 and tn % 128 == 0

    grid = (n_pad // block_m, d // tn)

    out_bytes = jnp.dtype(out_dtype).itemsize
    cost = pl.CostEstimate(
        flops=2 * n * d * (raw_dim + d),
        transcendentals=n * d,
        bytes_accessed=(n * raw_dim * 4          # x
                        + raw_dim * d * 4        # W1
                        + 2 * d * 4              # b1, b2
                        + d * d * 2              # W2 (bf16)
                        + n * d * out_bytes),    # out
    )

    out = pl.pallas_call(
        _camera_embedder_kernel,
        out_shape=jax.ShapeDtypeStruct((n_pad, d), out_dtype),
        grid=grid,
        in_specs=[
            pl.BlockSpec((block_m, raw_dim), lambda i, j: (i, 0)),  # x: streamed by row
            pl.BlockSpec((raw_dim, d), lambda i, j: (0, 0)),        # W1: VMEM-resident
            pl.BlockSpec((1, d), lambda i, j: (0, 0)),              # b1: VMEM-resident
            pl.BlockSpec((d, tn), lambda i, j: (0, j)),             # W2: column tiles
            pl.BlockSpec((1, tn), lambda i, j: (0, j)),             # b2: column tiles
        ],
        out_specs=pl.BlockSpec((block_m, tn), lambda i, j: (i, j)),
        compiler_params=pltpu.CompilerParams(
            dimension_semantics=("parallel", "parallel"),
            vmem_limit_bytes=64 * 1024 * 1024,
        ),
        cost_estimate=cost,
    )(x_f32, w1_f32, b1_f32, w2_bf16, b2_f32)

    return out[:n]


class CameraEmbedderPallas:
    """JAX/Pallas port of CameraEmbedder: Linear(raw, D) -> SiLU -> Linear(D, D)."""

    def __init__(self, raw_dim: int, embed_dim: int, key):
        self.raw_dim = raw_dim
        self.embed_dim = embed_dim
        k1, k2, k3, k4 = jax.random.split(key, 4)
        # Weights stored already transposed to (in, out) (PyTorch nn.Linear is (out, in)).
        self.w1 = jax.random.normal(k1, (raw_dim, embed_dim), jnp.float32) * 0.02
        self.b1 = jax.random.normal(k2, (embed_dim,), jnp.float32) * 0.02
        self.w2 = jax.random.normal(k3, (embed_dim, embed_dim), jnp.float32) * 0.02
        self.b2 = jax.random.normal(k4, (embed_dim,), jnp.float32) * 0.02
        # Kernel-ready parameter copies, converted ONCE here (not per forward call).
        self._w1_f32 = self.w1                               # layer 1 stays f32
        self._b1_f32 = self.b1.reshape(1, embed_dim)
        self._w2_bf16 = self.w2.astype(jnp.bfloat16)          # layer 2 MXU operand
        self._b2_f32 = self.b2.reshape(1, embed_dim)

    def __call__(self, camera, **kwargs):
        assert camera.shape[-1] == self.raw_dim
        emb = camera_embedder_pallas(camera, self._w1_f32, self._b1_f32,
                                     self._w2_bf16, self._b2_f32, **kwargs)
        assert emb.shape[-1] == self.embed_dim
        return emb


def _camera_embedder_ref(camera, w1, b1, w2, b2):
    h = camera @ w1 + b1
    h = h * jax.nn.sigmoid(h)
    return h @ w2 + b2


if __name__ == "__main__":
    key = jax.random.PRNGKey(0)
    k_params, k_params2, k_cam_small, k_cam_big, k_cam_wide = jax.random.split(key, 5)

    # bf16 layer-2 MXU path vs f32 reference -> looser tolerance than pure-f32.
    ATOL, RTOL = 2e-3, 2e-2

    # --- Model 1: embed_dim = 128 (lane-dense minimum) -----------------------------
    CAMERA_EMBED_DIM = 128
    model = CameraEmbedderPallas(RAW_DIM, CAMERA_EMBED_DIM, key=k_params)

    # Case 1: tiny batch (N=2) -> small-N fast path (pure XLA fusion, no kernel launch).
    camera_small = jax.random.normal(k_cam_small, (2, RAW_DIM), jnp.float32)
    out_small = jax.block_until_ready(model(camera_small))
    ref_small = _camera_embedder_ref(camera_small, model.w1, model.b1, model.w2, model.b2)
    assert out_small.shape == (2, CAMERA_EMBED_DIM), out_small.shape
    assert jnp.allclose(out_small, ref_small, atol=ATOL, rtol=RTOL), float(
        jnp.max(jnp.abs(out_small - ref_small)))

    # Case 2: larger flattened (batch x views) camera set -> Pallas kernel path with an
    # adaptive row tile (N=515 -> block_m=176, only 13 padded rows) and a parallel grid.
    camera_big = jax.random.normal(k_cam_big, (515, RAW_DIM), jnp.float32)
    out_big = jax.block_until_ready(model(camera_big))
    ref_big = _camera_embedder_ref(camera_big, model.w1, model.b1, model.w2, model.b2)
    assert out_big.shape == (515, CAMERA_EMBED_DIM), out_big.shape
    assert jnp.allclose(out_big, ref_big, atol=ATOL, rtol=RTOL), float(
        jnp.max(jnp.abs(out_big - ref_big)))

    # --- Model 2: embed_dim = 256 with forced TN=128 -> exercises the column-parallel
    # grid axis (grid = (1, 2)), same fused kernel body. ------------------------------
    WIDE_EMBED_DIM = 256
    model_wide = CameraEmbedderPallas(RAW_DIM, WIDE_EMBED_DIM, key=k_params2)
    camera_wide = jax.random.normal(k_cam_wide, (96, RAW_DIM), jnp.float32)
    out_wide = jax.block_until_ready(model_wide(camera_wide, tn=128))
    ref_wide = _camera_embedder_ref(camera_wide, model_wide.w1, model_wide.b1,
                                    model_wide.w2, model_wide.b2)
    assert out_wide.shape == (96, WIDE_EMBED_DIM), out_wide.shape
    assert jnp.allclose(out_wide, ref_wide, atol=ATOL, rtol=RTOL), float(
        jnp.max(jnp.abs(out_wide - ref_wide)))

    print("KERNEL_OK")
</pallas_src>

<mosaic_0001>
module attributes {stable_mosaic.version = 11 : i64} {
  func.func @_camera_embedder_kernel(%arg0: i32, %arg1: i32, %arg2: memref<176x16xf32, #tpu.memory_space<vmem>>, %arg3: memref<16x128xf32, #tpu.memory_space<vmem>>, %arg4: memref<1x128xf32, #tpu.memory_space<vmem>>, %arg5: memref<128x128xbf16, #tpu.memory_space<vmem>>, %arg6: memref<1x128xf32, #tpu.memory_space<vmem>>, %arg7: memref<176x128xf32, #tpu.memory_space<vmem>>) attributes {dimension_semantics = [#tpu.dimension_semantics<parallel>, #tpu.dimension_semantics<parallel>], iteration_bounds = array<i64: 3, 1>, scalar_prefetch = 0 : i64, scratch_operands = 0 : i64, tpu.core_type = #tpu.core_type<tc>, window_params = [{transform_indices = @transform_0, window_bounds = array<i64: 176, 16>}, {pipeline_mode = #tpu.pipeline_mode<synchronous>, transform_indices = @transform_1, window_bounds = array<i64: 16, 128>}, {pipeline_mode = #tpu.pipeline_mode<synchronous>, transform_indices = @transform_2, window_bounds = array<i64: 1, 128>}, {transform_indices = @transform_3, window_bounds = array<i64: 128, 128>}, {transform_indices = @transform_4, window_bounds = array<i64: 1, 128>}, {transform_indices = @transform_5, window_bounds = array<i64: 176, 128>}]} {
    %c0 = arith.constant 0 : index
    %c0_0 = arith.constant 0 : index
    %0 = vector.load %arg2[%c0, %c0_0] : memref<176x16xf32, #tpu.memory_space<vmem>>, vector<176x16xf32>
    %c0_1 = arith.constant 0 : index
    %c0_2 = arith.constant 0 : index
    %1 = vector.load %arg3[%c0_1, %c0_2] : memref<16x128xf32, #tpu.memory_space<vmem>>, vector<16x128xf32>
    %cst = arith.constant dense<0.000000e+00> : vector<176x128xf32>
    %2 = tpu.matmul %0, %1, %cst {dimension_numbers = #tpu.dot_dimension_numbers<[1], [0], [0], [1], [0, 0, 1, 1], [], []>} : vector<176x16xf32>, vector<16x128xf32>, vector<176x128xf32> -> vector<176x128xf32>
    %c0_3 = arith.constant 0 : index
    %c0_4 = arith.constant 0 : index
    %3 = vector.load %arg4[%c0_3, %c0_4] : memref<1x128xf32, #tpu.memory_space<vmem>>, vector<1x128xf32>
    %4 = vector.broadcast %3 : vector<1x128xf32> to vector<176x128xf32>
    %5 = arith.addf %2, %4 : vector<176x128xf32>
    %cst_5 = arith.constant 0.000000e+00 : f32
    %6 = vector.broadcast %cst_5 : f32 to vector<176x128xf32>
    %7 = arith.subf %6, %5 : vector<176x128xf32>
    %8 = math.exp %7 : vector<176x128xf32>
    %cst_6 = arith.constant 1.000000e+00 : f32
    %9 = vector.broadcast %cst_6 : f32 to vector<176x128xf32>
    %10 = arith.addf %9, %8 : vector<176x128xf32>
    %11 = tpu.reciprocal %10 {approx = true} : vector<176x128xf32> -> vector<176x128xf32>
    %12 = arith.mulf %5, %11 : vector<176x128xf32>
    %13 = arith.truncf %12 : vector<176x128xf32> to vector<176x128xbf16>
    %c0_7 = arith.constant 0 : index
    %c0_8 = arith.constant 0 : index
    %14 = vector.load %arg5[%c0_7, %c0_8] : memref<128x128xbf16, #tpu.memory_space<vmem>>, vector<128x128xbf16>
    %cst_9 = arith.constant dense<0.000000e+00> : vector<176x128xf32>
    %15 = tpu.matmul %13, %14, %cst_9 {dimension_numbers = #tpu.dot_dimension_numbers<[1], [0], [0], [1], [0, 0, 1, 1], [], []>} : vector<176x128xbf16>, vector<128x128xbf16>, vector<176x128xf32> -> vector<176x128xf32>
    %c0_10 = arith.constant 0 : index
    %c0_11 = arith.constant 0 : index
    %16 = vector.load %arg6[%c0_10, %c0_11] : memref<1x128xf32, #tpu.memory_space<vmem>>, vector<1x128xf32>
    %17 = vector.broadcast %16 : vector<1x128xf32> to vector<176x128xf32>
    %18 = arith.addf %15, %17 : vector<176x128xf32>
    %c0_12 = arith.constant 0 : index
    %c0_13 = arith.constant 0 : index
    %19 = vector.load %arg7[%c0_12, %c0_13] : memref<176x128xf32, #tpu.memory_space<vmem>>, vector<176x128xf32>
    tpu.vector_store %arg7[%c0_12, %c0_13], %18 {strides = array<i32>} : memref<176x128xf32, #tpu.memory_space<vmem>>, vector<176x128xf32>,
    return
  }
  func.func @transform_0(%arg0: i32, %arg1: i32) -> (i32, i32) {
    %c0_i32 = arith.constant 0 : i32
    %c0_i32_0 = arith.constant 0 : i32
    return %arg0, %c0_i32 : i32, i32
  }
  func.func @transform_1(%arg0: i32, %arg1: i32) -> (i32, i32) {
    %c0_i32 = arith.constant 0 : i32
    %c0_i32_0 = arith.constant 0 : i32
    %c0_i32_1 = arith.constant 0 : i32
    return %c0_i32, %c0_i32_0 : i32, i32
  }
  func.func @transform_2(%arg0: i32, %arg1: i32) -> (i32, i32) {
    %c0_i32 = arith.constant 0 : i32
    %c0_i32_0 = arith.constant 0 : i32
    %c0_i32_1 = arith.constant 0 : i32
    return %c0_i32, %c0_i32_0 : i32, i32
  }
  func.func @transform_3(%arg0: i32, %arg1: i32) -> (i32, i32) {
    %c0_i32 = arith.constant 0 : i32
    %c0_i32_0 = arith.constant 0 : i32
    return %c0_i32, %arg1 : i32, i32
  }
  func.func @transform_4(%arg0: i32, %arg1: i32) -> (i32, i32) {
    %c0_i32 = arith.constant 0 : i32
    %c0_i32_0 = arith.constant 0 : i32
    return %c0_i32, %arg1 : i32, i32
  }
  func.func @transform_5(%arg0: i32, %arg1: i32) -> (i32, i32) {
    %c0_i32 = arith.constant 0 : i32
    return %arg0, %arg1 : i32, i32
  }
}

</mosaic_0001>

<llo_original>
// kernel: tpu_custom_call.1
$region0: #{tpu_custom_call.1}
  #allocation0 [shape = 'u32[]', space=smem, size = 0x4, offset = 0x4, fixed_abs, tag = 'smem constant byte address 0x4 - core index']
  #allocation1 [shape = 'u32[144,128]{1,0:T(1,128)}', space=vmem, size = 0x12000, scoped, tag = 'internal scratch']
  %s0 = inlined_call_operand.hbm [shape: f32[528,16], index: 0, kind: input, shape index: {}]
  %s1 = inlined_call_operand.hbm [shape: f32[16,128], index: 1, kind: input, shape index: {}]
  %s2 = inlined_call_operand.hbm [shape: f32[1,128], index: 2, kind: input, shape index: {}]
  %s3 = inlined_call_operand.hbm [shape: bf16[128,128], index: 3, kind: input, shape index: {}]
  %s4 = inlined_call_operand.hbm [shape: f32[1,128], index: 4, kind: input, shape index: {}]
  %s5 = inlined_call_operand.hbm [shape: f32[528,128], index: 5, kind: output, shape index: {}]
  %s6 = sld [smem:[#allocation0]]
  $region73: #{tpu_custom_call.1} parent=0
    _
  %s8 = ssub.s32 1, %s6
  %s9 = scalar_select 0, %s8, %s6
  $region1: #{tpu_custom_call.1} parent=0
    #allocation2 [shape = 'u8[180224]{0}', space=vmem, size = 0x2c000, scoped, tag = 'input window, operand 0']
    #allocation3 [shape = 's32[2]{0}', space=sflag, size = 0x8, scoped, tag = 'scoped memory for tpu_custom_call.1']
    #allocation4 [shape = 's32[2]{0}', space=sflag, size = 0x8, scoped, tag = 'scoped memory for tpu_custom_call.1']
    #allocation5 [shape = 'u8[8192]{0}', space=vmem, size = 0x2000, scoped, tag = 'input window, operand 1, single buffered']
    #allocation6 [shape = 's32[1]{0}', space=sflag, size = 0x4, scoped, tag = 'scoped memory for tpu_custom_call.1']
    #allocation7 [shape = 'u8[512]{0}', space=vmem, size = 0x400, scoped, tag = 'input window, operand 2, single buffered']
    #allocation8 [shape = 'u8[32768]{0}', space=vmem, size = 0x8000, scoped, tag = 'input window, operand 3, single buffered']
    #allocation9 [shape = 's32[1]{0}', space=sflag, size = 0x4, scoped, tag = 'scoped memory for tpu_custom_call.1']
    #allocation10 [shape = 'u8[512]{0}', space=vmem, size = 0x400, scoped, tag = 'input window, operand 4, single buffered']
    #allocation11 [shape = 'u8[180224]{0}', space=vmem, size = 0x2c000, scoped, tag = 'output window, operand 0']
    %10 = vsyncpa [#allocation3], 0
    %s11 = scalar_lea.sflag [#allocation3], 1
    %12 = vsyncpa %s11, 0
    %13 = vsyncpa [#allocation6], 0
    %14 = vsyncpa [#allocation9], 0
    %15 = vsyncpa [#allocation4], 0
    %s16 = scalar_lea.sflag [#allocation4], 1
    %17 = vsyncpa %s16, 0
    loop: start=0, step=1, limit=5
    $region2: #{tpu_custom_call.1} parent=1 // loop_pre_header
      _
    $region3: #{tpu_custom_call.1} parent=1 // loop_header
      %s19 = sphi 0, %s23
      %p20 = scmp.ge.s32.totalorder %s19, 5
      %s26 = sphi 0, %s38
      %s27 = sphi 0, %s34
      %s28 = sphi 0, %s26
      %s29 = sphi 0, %s27
      %s30 = sphi 0, %s28
      %s31 = sphi 0, %s29
      %s41 = sphi 0, %s43
      %s44 = sphi 0, %s41
      %s45 = sphi 0, %s44
      %s61 = sphi 0, %s45
      %s65 = sphi 0, %s65
      %s67 = sphi 0, %s65
      %s68 = sphi 0, %s67
      %s82 = sphi 0, %s68
      %s86 = sphi 0, %s86
      %s88 = sphi 0, %s86
      %s89 = sphi 0, %s88
      %s103 = sphi 0, %s89
      %s109 = sphi 0, %s111
      %s112 = sphi 0, %s109
      %s113 = sphi 0, %s112
      %s129 = sphi 0, %s113
      %s135 = sphi 0, %s137
      %s138 = sphi 0, %s135
      %s139 = sphi 0, %s138
      %s155 = sphi 0, %s139
      %s163 = sphi 0, %s165
      %s166 = sphi 0, %s163
      %s167 = sphi 0, %s166
      %s183 = sphi 0, %s167
    $region4: #{tpu_custom_call.1} parent=1 // loop_header_branch
      %22 = sbr.rel (%p20) target = $region8
    $region5: #{tpu_custom_call.1} parent=1 // loop_body
      %s24 = ssub.s32 %s19, 1
      %s25 = ssub.s32 %s19, 2
      %s32 = sadd.s32 1, %s27
      %p33 = scmp.ge.s32.totalorder %s32, 1
      %s34 = scalar_select %p33, 0, %s32
      %s35 = sadd.s32 1, %s26
      %s36 = scalar_select %p33, %s35, %s26
      %p37 = scmp.ge.s32.totalorder %s36, 3
      %s38 = scalar_select %p37, 0, %s36
      %s39 = ssub.s32 %s26, %s38
      %p40 = scmp.eq.s32.totalorder %s39, 0
      %s42 = sadd.s32 %s41, 1
      %s43 = scalar_select %p40, %s41, %s42
      %p46 = pneg %p40
      %p47 = scmp.eq.s32.totalorder %s19, 2
      %p48 = por %p46, %p47
      %p49 = scmp.ne.s32.totalorder %s41, %s44
      %p50 = scmp.eq.s32.totalorder %s19, 0
      %p51 = por %p49, %p50
      %p52 = scmp.ne.s32.totalorder %s41, %s44
      %p53 = scmp.eq.s32.totalorder %s24, 2
      %p54 = por %p52, %p53
      %p55 = scmp.ne.s32.totalorder %s44, %s45
      %p56 = scmp.eq.s32.totalorder %s24, 0
      %p57 = por %p55, %p56
      %p58 = scmp.ne.s32.totalorder %s44, %s45
      %p59 = scmp.eq.s32.totalorder %s25, 2
      %p60 = por %p58, %p59
      %p62 = scmp.ne.s32.totalorder %s45, %s61
      %p63 = scmp.eq.s32.totalorder %s25, 0
      %p64 = por %p62, %p63
      %s66 = sadd.s32 %s65, 1
      %p69 = scmp.eq.s32.totalorder %s19, 2
      %p70 = scmp.ne.s32.totalorder %s65, %s67
      %p71 = scmp.eq.s32.totalorder %s19, 0
      %p72 = por %p70, %p71
      %p73 = scmp.ne.s32.totalorder %s65, %s67
      %p74 = scmp.eq.s32.totalorder %s24, 2
      %p75 = por %p73, %p74
      %p76 = scmp.ne.s32.totalorder %s67, %s68
      %p77 = scmp.eq.s32.totalorder %s24, 0
      %p78 = por %p76, %p77
      %p79 = scmp.ne.s32.totalorder %s67, %s68
      %p80 = scmp.eq.s32.totalorder %s25, 2
      %p81 = por %p79, %p80
      %p83 = scmp.ne.s32.totalorder %s68, %s82
      %p84 = scmp.eq.s32.totalorder %s25, 0
      %p85 = por %p83, %p84
      %s87 = sadd.s32 %s86, 1
      %p90 = scmp.eq.s32.totalorder %s19, 2
      %p91 = scmp.ne.s32.totalorder %s86, %s88
      %p92 = scmp.eq.s32.totalorder %s19, 0
      %p93 = por %p91, %p92
      %p94 = scmp.ne.s32.totalorder %s86, %s88
      %p95 = scmp.eq.s32.totalorder %s24, 2
      %p96 = por %p94, %p95
      %p97 = scmp.ne.s32.totalorder %s88, %s89
      %p98 = scmp.eq.s32.totalorder %s24, 0
      %p99 = por %p97, %p98
      %p100 = scmp.ne.s32.totalorder %s88, %s89
      %p101 = scmp.eq.s32.totalorder %s25, 2
      %p102 = por %p100, %p101
      %p104 = scmp.ne.s32.totalorder %s89, %s103
      %p105 = scmp.eq.s32.totalorder %s25, 0
      %p106 = por %p104, %p105
      %s107 = ssub.s32 %s27, %s34
      %p108 = scmp.eq.s32.totalorder %s107, 0
      %s110 = sadd.s32 %s109, 1
      %s111 = scalar_select %p108, %s109, %s110
      %p114 = pneg %p108
      %p115 = scmp.eq.s32.totalorder %s19, 2
      %p116 = por %p114, %p115
      %p117 = scmp.ne.s32.totalorder %s109, %s112
      %p118 = scmp.eq.s32.totalorder %s19, 0
      %p119 = por %p117, %p118
      %p120 = scmp.ne.s32.totalorder %s109, %s112
      %p121 = scmp.eq.s32.totalorder %s24, 2
      %p122 = por %p120, %p121
      %p123 = scmp.ne.s32.totalorder %s112, %s113
      %p124 = scmp.eq.s32.totalorder %s24, 0
      %p125 = por %p123, %p124
      %p126 = scmp.ne.s32.totalorder %s112, %s113
      %p127 = scmp.eq.s32.totalorder %s25, 2
      %p128 = por %p126, %p127
      %p130 = scmp.ne.s32.totalorder %s113, %s129
      %p131 = scmp.eq.s32.totalorder %s25, 0
      %p132 = por %p130, %p131
      %s133 = ssub.s32 %s27, %s34
      %p134 = scmp.eq.s32.totalorder %s133, 0
      %s136 = sadd.s32 %s135, 1
      %s137 = scalar_select %p134, %s135, %s136
      %p140 = pneg %p134
      %p141 = scmp.eq.s32.totalorder %s19, 2
      %p142 = por %p140, %p141
      %p143 = scmp.ne.s32.totalorder %s135, %s138
      %p144 = scmp.eq.s32.totalorder %s19, 0
      %p145 = por %p143, %p144
      %p146 = scmp.ne.s32.totalorder %s135, %s138
      %p147 = scmp.eq.s32.totalorder %s24, 2
      %p148 = por %p146, %p147
      %p149 = scmp.ne.s32.totalorder %s138, %s139
      %p150 = scmp.eq.s32.totalorder %s24, 0
      %p151 = por %p149, %p150
      %p152 = scmp.ne.s32.totalorder %s138, %s139
      %p153 = scmp.eq.s32.totalorder %s25, 2
      %p154 = por %p152, %p153
      %p156 = scmp.ne.s32.totalorder %s139, %s155
      %p157 = scmp.eq.s32.totalorder %s25, 0
      %p158 = por %p156, %p157
      %s159 = ssub.s32 %s26, %s38
      %s160 = ssub.s32 %s27, %s34
      %s161 = sor.u32 %s159, %s160
      %p162 = scmp.eq.s32.totalorder %s161, 0
      %s164 = sadd.s32 %s163, 1
      %s165 = scalar_select %p162, %s163, %s164
      %p168 = pneg %p162
      %p169 = scmp.eq.s32.totalorder %s19, 2
      %p170 = por %p168, %p169
      %p171 = scmp.ne.s32.totalorder %s163, %s166
      %p172 = scmp.eq.s32.totalorder %s19, 0
      %p173 = por %p171, %p172
      %p174 = scmp.ne.s32.totalorder %s163, %s166
      %p175 = scmp.eq.s32.totalorder %s24, 2
      %p176 = por %p174, %p175
      %p177 = scmp.ne.s32.totalorder %s166, %s167
      %p178 = scmp.eq.s32.totalorder %s24, 0
      %p179 = por %p177, %p178
      %p180 = scmp.ne.s32.totalorder %s166, %s167
      %p181 = scmp.eq.s32.totalorder %s25, 2
      %p182 = por %p180, %p181
      %p184 = scmp.ne.s32.totalorder %s167, %s183
      %p185 = scmp.eq.s32.totalorder %s25, 0
      %p186 = por %p184, %p185
      %p187 = scmp.le.s32.totalorder 1, %s19
      %p188 = scmp.lt.s32.totalorder %s19, 4
      %p189 = pnand %p187, %p188
      %p190 = pneg %p189
      // Predicated region
      $region9: #{tpu_custom_call.1} parent=5 // pred_check
        _
      $region10: #{tpu_custom_call.1} parent=5 // pred_check_branch
        %192 = sbr.rel (%p189) target = $region12
      $region11: #{tpu_custom_call.1} parent=5 // pred_region
        %s193 = ssub.s32 %s19, 1
        // Predicated region
        $region13: #{tpu_custom_call.1} parent=11 // pred_check
          %p194 = pneg %p78
        $region14: #{tpu_custom_call.1} parent=11 // pred_check_branch
          %196 = sbr.rel (%p194) target = $region16
        $region15: #{tpu_custom_call.1} parent=11 // pred_region
          %s198 = ssub.s32 256, 256
          %199 = vsyncadd [#allocation6], %s198
          %s200 = sshll.u32 [#allocation5], 4
          %s201 = int_to_ptr.vmem [resolvable:$true] %s200
          %206 = dma.hbm_to_vmem [thread:$0]  %s1, 256, %s201, [#allocation6], 128, 128, 8
        $region16: #{tpu_custom_call.1} parent=11 // pred_fallthru
          _
        // Predicated region
        $region17: #{tpu_custom_call.1} parent=11 // pred_check
          %p207 = pneg %p99
        $region18: #{tpu_custom_call.1} parent=11 // pred_check_branch
          %209 = sbr.rel (%p207) target = $region20
        $region19: #{tpu_custom_call.1} parent=11 // pred_region
          %s211 = ssub.s32 16, 16
          %212 = vsyncadd [#allocation6], %s211
          %s214 = sshll.u32 [#allocation7], 4
          %s215 = int_to_ptr.vmem [resolvable:$true] %s214
          %217 = dma.hbm_to_vmem [thread:$0]  %s2, 16, %s215, [#allocation6]
        $region20: #{tpu_custom_call.1} parent=11 // pred_fallthru
          _
        // Predicated region
        $region21: #{tpu_custom_call.1} parent=11 // pred_check
          %p218 = pneg %p125
        $region22: #{tpu_custom_call.1} parent=11 // pred_check_branch
          %220 = sbr.rel (%p218) target = $region24
        $region23: #{tpu_custom_call.1} parent=11 // pred_region
          %s222 = ssub.s32 1024, 1024
          %223 = vsyncadd [#allocation9], %s222
          %s224 = smul.addr %s29, 64
          %s225 = scalar_lea.hbm %s3, %s224
          %s226 = sshll.u32 [#allocation8], 4
          %s227 = int_to_ptr.vmem [resolvable:$true] %s226
          %232 = dma.hbm_to_vmem [thread:$0]  %s225, 1024, %s227, [#allocation9], 64, 64, 4
        $region24: #{tpu_custom_call.1} parent=11 // pred_fallthru
          _
        // Predicated region
        $region25: #{tpu_custom_call.1} parent=11 // pred_check
          %p233 = pneg %p151
        $region26: #{tpu_custom_call.1} parent=11 // pred_check_branch
          %235 = sbr.rel (%p233) target = $region28
        $region27: #{tpu_custom_call.1} parent=11 // pred_region
          %s237 = ssub.s32 16, 16
          %238 = vsyncadd [#allocation9], %s237
          %s239 = smul.addr %s29, 16
          %s240 = scalar_lea.hbm %s4, %s239
          %s242 = sshll.u32 [#allocation10], 4
          %s243 = int_to_ptr.vmem [resolvable:$true] %s242
          %245 = dma.hbm_to_vmem [thread:$0]  %s240, 16, %s243, [#allocation9]
        $region28: #{tpu_custom_call.1} parent=11 // pred_fallthru
          _
      $region12: #{tpu_custom_call.1} parent=5 // pred_fallthru
        _
      %p246 = scmp.lt.s32.totalorder %s19, 3
      // Predicated region
      $region29: #{tpu_custom_call.1} parent=5 // pred_check
        %p247 = pneg %p246
      $region30: #{tpu_custom_call.1} parent=5 // pred_check_branch
        %249 = sbr.rel (%p247) target = $region32
      $region31: #{tpu_custom_call.1} parent=5 // pred_region
        // Predicated region
        $region33: #{tpu_custom_call.1} parent=31 // pred_check
          %p250 = pneg %p51
        $region34: #{tpu_custom_call.1} parent=31 // pred_check_branch
          %252 = sbr.rel (%p250) target = $region36
        $region35: #{tpu_custom_call.1} parent=31 // pred_region
          %s253 = sand.u32 %s41, 1
          %s254 = scalar_lea.sflag [#allocation3], %s253
          %s255 = sand.u32 %s41, 1
          %s256 = smul.addr %s255, 176
          %s257 = scalar_lea.vmem [#allocation2], %s256
          %s258 = smul.u32 22, %s26
          %s260 = ssub.s32 2816, 2816
          %261 = vsyncadd %s254, %s260
          %s262 = smul.addr %s258, 128
          %s263 = scalar_lea.hbm %s0, %s262
          %s264 = sshll.u32 %s257, 4
          %s265 = int_to_ptr.vmem [resolvable:$true] %s264
          %270 = dma.hbm_to_vmem [thread:$0]  %s263, 2816, %s265, %s254, 128, 128, 8
        $region36: #{tpu_custom_call.1} parent=31 // pred_fallthru
          _
      $region32: #{tpu_custom_call.1} parent=5 // pred_fallthru
        _
      %p271 = scmp.le.s32.totalorder 1, %s19
      %p272 = scmp.lt.s32.totalorder %s19, 4
      %p273 = pnand %p271, %p272
      %p274 = pneg %p273
      // Predicated region
      $region37: #{tpu_custom_call.1} parent=5 // pred_check
        _
      $region38: #{tpu_custom_call.1} parent=5 // pred_check_branch
        %276 = sbr.rel (%p273) target = $region40
      $region39: #{tpu_custom_call.1} parent=5 // pred_region
        %s277 = ssub.s32 %s19, 1
        %s278 = sand.u32 %s44, 1
        %s279 = scalar_lea.sflag [#allocation3], %s278
        %s280 = sand.u32 %s44, 1
        %s281 = smul.addr %s280, 176
        %s282 = scalar_lea.vmem [#allocation2], %s281
        // Predicated region
        $region41: #{tpu_custom_call.1} parent=39 // pred_check
          %p283 = pneg %p57
        $region42: #{tpu_custom_call.1} parent=39 // pred_check_branch
          %285 = sbr.rel (%p283) target = $region44
        $region43: #{tpu_custom_call.1} parent=39 // pred_region
          %286 = dma.done %s279, 2816
        $region44: #{tpu_custom_call.1} parent=39 // pred_fallthru
          _
        // Predicated region
        $region45: #{tpu_custom_call.1} parent=39 // pred_check
          %p287 = pneg %p78
        $region46: #{tpu_custom_call.1} parent=39 // pred_check_branch
          %289 = sbr.rel (%p287) target = $region48
        $region47: #{tpu_custom_call.1} parent=39 // pred_region
          %290 = dma.done [#allocation6], 256
        $region48: #{tpu_custom_call.1} parent=39 // pred_fallthru
          _
        // Predicated region
        $region49: #{tpu_custom_call.1} parent=39 // pred_check
          %p291 = pneg %p99
        $region50: #{tpu_custom_call.1} parent=39 // pred_check_branch
          %293 = sbr.rel (%p291) target = $region52
        $region51: #{tpu_custom_call.1} parent=39 // pred_region
          %294 = dma.done [#allocation6], 16
        $region52: #{tpu_custom_call.1} parent=39 // pred_fallthru
          _
        // Predicated region
        $region53: #{tpu_custom_call.1} parent=39 // pred_check
          %p295 = pneg %p125
        $region54: #{tpu_custom_call.1} parent=39 // pred_check_branch
          %297 = sbr.rel (%p295) target = $region56
        $region55: #{tpu_custom_call.1} parent=39 // pred_region
          %298 = dma.done [#allocation9], 1024
        $region56: #{tpu_custom_call.1} parent=39 // pred_fallthru
          _
        // Predicated region
        $region57: #{tpu_custom_call.1} parent=39 // pred_check
          %p299 = pneg %p151
        $region58: #{tpu_custom_call.1} parent=39 // pred_check_branch
          %301 = sbr.rel (%p299) target = $region60
        $region59: #{tpu_custom_call.1} parent=39 // pred_region
          %302 = dma.done [#allocation9], 16
        $region60: #{tpu_custom_call.1} parent=39 // pred_fallthru
          _
        %s303 = sand.u32 %s44, 1
        %s304 = scalar_lea.sflag [#allocation3], %s303
        %s305 = sand.u32 %s44, 1
        %s306 = smul.addr %s305, 176
        %s307 = scalar_lea.vmem [#allocation2], %s306
        %p308 = pneg %p57
        %p309 = pneg %p54
        %p310 = pneg %p78
        %p311 = pneg %p75
        %p312 = pneg %p99
        %p313 = pneg %p96
        %p314 = pneg %p125
        %p315 = pneg %p122
        %p316 = pneg %p151
        %p317 = pneg %p148
        %p318 = pneg %p179
        %p319 = pneg %p176
        %s320 = sand.u32 %s166, 1
        %s321 = scalar_lea.sflag [#allocation4], %s320
        %s322 = sand.u32 %s166, 1
        %s323 = smul.addr %s322, 176
        %s324 = scalar_lea.vmem [#allocation11], %s323
        %s325 = smul.u32 22, %s28
        %s326 = smul.u32 22, %s28
        %v328 = vld [vmem:[%s282] sm:$0xff]
        %v329 = vld [vmem:[%s282 + $0x8] sm:$0xff]
        %v330 = vld [vmem:[%s282 + $0x10] sm:$0xff]
        %v331 = vld [vmem:[%s282 + $0x18] sm:$0xff]
        %v332 = vld [vmem:[%s282 + $0x20] sm:$0xff]
        %v333 = vld [vmem:[%s282 + $0x28] sm:$0xff]
        %v334 = vld [vmem:[%s282 + $0x30] sm:$0xff]
        %v335 = vld [vmem:[%s282 + $0x38] sm:$0xff]
        %v336 = vld [vmem:[%s282 + $0x40] sm:$0xff]
        %v337 = vld [vmem:[%s282 + $0x48] sm:$0xff]
        %v338 = vld [vmem:[%s282 + $0x50] sm:$0xff]
        %v339 = vld [vmem:[%s282 + $0x58] sm:$0xff]
        %v340 = vld [vmem:[%s282 + $0x60] sm:$0xff]
        %v341 = vld [vmem:[%s282 + $0x68] sm:$0xff]
        %v342 = vld [vmem:[%s282 + $0x70] sm:$0xff]
        %v343 = vld [vmem:[%s282 + $0x78] sm:$0xff]
        %v344 = vld [vmem:[%s282 + $0x80] sm:$0xff]
        %v345 = vld [vmem:[%s282 + $0x88] sm:$0xff]
        %v346 = vld [vmem:[%s282 + $0x90] sm:$0xff]
        %v347 = vld [vmem:[%s282 + $0x98] sm:$0xff]
        %v348 = vld [vmem:[%s282 + $0xa0] sm:$0xff]
        %v349 = vld [vmem:[%s282 + $0xa8] sm:$0xff]
        %v350 = vld [vmem:[#allocation5] sm:$0xff]
        %v351 = vld [vmem:[#allocation5 + $0x8] sm:$0xff]
        %v352 = vld [vmem:[#allocation7] sm:$0x1]
        %v354 = vlaneseq
        %v355 = vshrl.u32 %v354, 7
        %v356 = vsub.s32 0, %v355
        %v357 = vrot.slane %v352, %v356
        %vm359 = vcmask 130048
        %v361 = vsel %vm359, %v328, 0
        %v364 = vsel %vm359, %v329, 0
        %v367 = vsel %vm359, %v330, 0
        %v370 = vsel %vm359, %v331, 0
        %v373 = vsel %vm359, %v332, 0
        %v376 = vsel %vm359, %v333, 0
        %v379 = vsel %vm359, %v334, 0
        %v382 = vsel %vm359, %v335, 0
        %v385 = vsel %vm359, %v336, 0
        %v388 = vsel %vm359, %v337, 0
        %v391 = vsel %vm359, %v338, 0
        %v394 = vsel %vm359, %v339, 0
        %v397 = vsel %vm359, %v340, 0
        %v400 = vsel %vm359, %v341, 0
        %v403 = vsel %vm359, %v342, 0
        %v406 = vsel %vm359, %v343, 0
        %v409 = vsel %vm359, %v344, 0
        %v412 = vsel %vm359, %v345, 0
        %v415 = vsel %vm359, %v346, 0
        %v418 = vsel %vm359, %v347, 0
        %v421 = vsel %vm359, %v348, 0
        %v424 = vsel %vm359, %v349, 0
        %426 = vmatprep.subr.mxu0 0.0
        %427 = vmatpush1.msra.mxu0 %v350
        %428 = vmatprep.subr.mxu0 0.0
        %429 = vmatpush1.msra.mxu0 %v351
        %430 = vmatprep.subr.mxu0 0.0
        %431 = vmatpush1.msra.mxu0 0.0
        %432 = vmatprep.subr.mxu0 0.0
        %433 = vmatpush1.msra.mxu0 0.0
        %434 = vmatprep.subr.mxu0 0.0
        %435 = vmatpush1.msra.mxu0 0.0
        %436 = vmatprep.subr.mxu0 0.0
        %437 = vmatpush1.msra.mxu0 0.0
        %438 = vmatprep.subr.mxu0 0.0
        %439 = vmatpush1.msra.mxu0 0.0
        %440 = vmatprep.subr.mxu0 0.0
        %441 = vmatpush1.msra.mxu0 0.0
        %442 = vmatprep.subr.mxu0 0.0
        %443 = vmatpush1.msra.mxu0 0.0
        %444 = vmatprep.subr.mxu0 0.0
        %445 = vmatpush1.msra.mxu0 0.0
        %446 = vmatprep.subr.mxu0 0.0
        %447 = vmatpush1.msra.mxu0 0.0
        %448 = vmatprep.subr.mxu0 0.0
        %449 = vmatpush1.msra.mxu0 0.0
        %450 = vmatprep.subr.mxu0 0.0
        %451 = vmatpush1.msra.mxu0 0.0
        %452 = vmatprep.subr.mxu0 0.0
        %453 = vmatpush1.msra.mxu0 0.0
        %454 = vmatprep.subr.mxu0 0.0
        %455 = vmatpush1.msra.mxu0 0.0
        %456 = vmatprep.subr.mxu0 0.0
        %457 = vmatpush1.msra.mxu0 0.0
        %458 = vmatprep.subr.mxu0 0.0
        %459 = vmatpush1.msra.mxu0 0.0
        %460 = vmatprep.subr.mxu0 0.0
        %461 = vmatpush1.msra.mxu0 0.0
        %462 = vmatprep.subr.mxu0 0.0
        %463 = vmatpush1.msra.mxu0 0.0
        %464 = vmatprep.subr.mxu0 0.0
        %465 = vmatpush1.msra.mxu0 0.0
        %466 = vmatprep.subr.mxu0 0.0
        %467 = vmatpush1.msra.mxu0 0.0
        %468 = vmatprep.subr.mxu0 0.0
        %469 = vmatpush1.msra.mxu0 0.0
        %470 = vmatprep.subr.mxu0 0.0
        %471 = vmatpush1.msra.mxu0 0.0
        %472 = vmatprep.subr.mxu0 0.0
        %473 = vmatpush1.msra.mxu0 0.0
        %474 = vmatprep.subr.mxu0 0.0
        %475 = vmatpush1.msra.mxu0 0.0
        %476 = vmatprep.subr.mxu0 0.0
        %477 = vmatpush1.msra.mxu0 0.0
        %478 = vmatprep.subr.mxu0 0.0
        %479 = vmatpush1.msra.mxu0 0.0
        %480 = vmatprep.subr.mxu0 0.0
        %481 = vmatpush1.msra.mxu0 0.0
        %482 = vmatprep.subr.mxu0 0.0
        %483 = vmatpush1.msra.mxu0 0.0
        %484 = vmatprep.subr.mxu0 0.0
        %485 = vmatpush1.msra.mxu0 0.0
        %486 = vmatprep.subr.mxu0 0.0
        %487 = vmatpush1.msra.mxu0 0.0
        %488 = vmatprep.subr.mxu0 0.0
        %489 = vmatpush1.msra.mxu0 0.0
        %490 = vmatprep.mubr.f32.mxu0 0.0
        %491 = vmatmul.mubr.f32.gmra.mrb[0].mxu0 %v361
        %v492 = vpop.f32.mrb[0].mxu0
        %v493 = vadd.f32 %v357, %v492
        %v494 = vpop.f32.mrb[0].mxu0
        %495 = vmatprep.mubr.f32.mxu0 0.0
        %496 = vmatmul.mubr.f32.gmra.mrb[0].mxu0 %v364
        %v497 = vpop.f32.mrb[0].mxu0
        %v498 = vadd.f32 %v357, %v497
        %v499 = vpop.f32.mrb[0].mxu0
        %500 = vmatprep.mubr.f32.mxu0 0.0
        %501 = vmatmul.mubr.f32.gmra.mrb[0].mxu0 %v367
        %v502 = vpop.f32.mrb[0].mxu0
        %v503 = vadd.f32 %v357, %v502
        %v504 = vpop.f32.mrb[0].mxu0
        %505 = vmatprep.mubr.f32.mxu0 0.0
        %506 = vmatmul.mubr.f32.gmra.mrb[0].mxu0 %v370
        %v507 = vpop.f32.mrb[0].mxu0
        %v508 = vadd.f32 %v357, %v507
        %v509 = vpop.f32.mrb[0].mxu0
        %510 = vmatprep.mubr.f32.mxu0 0.0
        %511 = vmatmul.mubr.f32.gmra.mrb[0].mxu0 %v373
        %v512 = vpop.f32.mrb[0].mxu0
        %v513 = vadd.f32 %v357, %v512
        %v514 = vpop.f32.mrb[0].mxu0
        %515 = vmatprep.mubr.f32.mxu0 0.0
        %516 = vmatmul.mubr.f32.gmra.mrb[0].mxu0 %v376
        %v517 = vpop.f32.mrb[0].mxu0
        %v518 = vadd.f32 %v357, %v517
        %v519 = vpop.f32.mrb[0].mxu0
        %520 = vmatprep.mubr.f32.mxu0 0.0
        %521 = vmatmul.mubr.f32.gmra.mrb[0].mxu0 %v379
        %v522 = vpop.f32.mrb[0].mxu0
        %v523 = vadd.f32 %v357, %v522
        %v524 = vpop.f32.mrb[0].mxu0
        %525 = vmatprep.mubr.f32.mxu0 0.0
        %526 = vmatmul.mubr.f32.gmra.mrb[0].mxu0 %v382
        %v527 = vpop.f32.mrb[0].mxu0
        %v528 = vadd.f32 %v357, %v527
        %v529 = vpop.f32.mrb[0].mxu0
        %530 = vmatprep.mubr.f32.mxu0 0.0
        %531 = vmatmul.mubr.f32.gmra.mrb[0].mxu0 %v385
        %v532 = vpop.f32.mrb[0].mxu0
        %v533 = vadd.f32 %v357, %v532
        %v534 = vpop.f32.mrb[0].mxu0
        %535 = vmatprep.mubr.f32.mxu0 0.0
        %536 = vmatmul.mubr.f32.gmra.mrb[0].mxu0 %v388
        %v537 = vpop.f32.mrb[0].mxu0
        %v538 = vadd.f32 %v357, %v537
        %v539 = vpop.f32.mrb[0].mxu0
        %540 = vmatprep.mubr.f32.mxu0 0.0
        %541 = vmatmul.mubr.f32.gmra.mrb[0].mxu0 %v391
        %v542 = vpop.f32.mrb[0].mxu0
        %v543 = vadd.f32 %v357, %v542
        %v544 = vpop.f32.mrb[0].mxu0
        %545 = vmatprep.mubr.f32.mxu0 0.0
        %546 = vmatmul.mubr.f32.gmra.mrb[0].mxu0 %v394
        %v547 = vpop.f32.mrb[0].mxu0
        %v548 = vadd.f32 %v357, %v547
        %v549 = vpop.f32.mrb[0].mxu0
        %550 = vmatprep.mubr.f32.mxu0 0.0
        %551 = vmatmul.mubr.f32.gmra.mrb[0].mxu0 %v397
        %v552 = vpop.f32.mrb[0].mxu0
        %v553 = vadd.f32 %v357, %v552
        %v554 = vpop.f32.mrb[0].mxu0
        %555 = vmatprep.mubr.f32.mxu0 0.0
        %556 = vmatmul.mubr.f32.gmra.mrb[0].mxu0 %v400
        %v557 = vpop.f32.mrb[0].mxu0
        %v558 = vadd.f32 %v357, %v557
        %v559 = vpop.f32.mrb[0].mxu0
        %560 = vmatprep.mubr.f32.mxu0 0.0
        %561 = vmatmul.mubr.f32.gmra.mrb[0].mxu0 %v403
        %v562 = vpop.f32.mrb[0].mxu0
        %v563 = vadd.f32 %v357, %v562
        %v564 = vpop.f32.mrb[0].mxu0
        %565 = vmatprep.mubr.f32.mxu0 0.0
        %566 = vmatmul.mubr.f32.gmra.mrb[0].mxu0 %v406
        %v567 = vpop.f32.mrb[0].mxu0
        %v568 = vadd.f32 %v357, %v567
        %v569 = vpop.f32.mrb[0].mxu0
        %570 = vmatprep.mubr.f32.mxu0 0.0
        %571 = vmatmul.mubr.f32.gmra.mrb[0].mxu0 %v409
        %v572 = vpop.f32.mrb[0].mxu0
        %v573 = vadd.f32 %v357, %v572
        %v574 = vpop.f32.mrb[0].mxu0
        %575 = vmatprep.mubr.f32.mxu0 0.0
        %576 = vmatmul.mubr.f32.gmra.mrb[0].mxu0 %v412
        %v577 = vpop.f32.mrb[0].mxu0
        %v578 = vadd.f32 %v357, %v577
        %v579 = vpop.f32.mrb[0].mxu0
        %580 = vmatprep.mubr.f32.mxu0 0.0
        %581 = vmatmul.mubr.f32.gmra.mrb[0].mxu0 %v415
        %v582 = vpop.f32.mrb[0].mxu0
        %v583 = vadd.f32 %v357, %v582
        %v584 = vpop.f32.mrb[0].mxu0
        %585 = vmatprep.mubr.f32.mxu0 0.0
        %586 = vmatmul.mubr.f32.gmra.mrb[0].mxu0 %v418
        %v587 = vpop.f32.mrb[0].mxu0
        %v588 = vadd.f32 %v357, %v587
        %v589 = vpop.f32.mrb[0].mxu0
        %590 = vmatprep.mubr.f32.mxu0 0.0
        %591 = vmatmul.mubr.f32.gmra.mrb[0].mxu0 %v421
        %v592 = vpop.f32.mrb[0].mxu0
        %v593 = vadd.f32 %v357, %v592
        %v594 = vpop.f32.mrb[0].mxu0
        %595 = vmatprep.mubr.f32.mxu0 0.0
        %596 = vmatmul.mubr.f32.gmra.mrb[0].mxu0 %v424
        %v597 = vpop.f32.mrb[0].mxu0
        %v598 = vadd.f32 %v357, %v597
        %v599 = vpop.f32.mrb[0].mxu0
        %600 = vdwg.mxu0
        %v601 = vsub.f32 0.0, %v493
        %v602 = vsub.f32 0.0, %v498
        %v603 = vsub.f32 0.0, %v503
        %v604 = vsub.f32 0.0, %v508
        %v605 = vsub.f32 0.0, %v513
        %v606 = vsub.f32 0.0, %v518
        %v607 = vsub.f32 0.0, %v523
        %v608 = vsub.f32 0.0, %v528
        %v609 = vsub.f32 0.0, %v533
        %v610 = vsub.f32 0.0, %v538
        %v611 = vsub.f32 0.0, %v543
        %v612 = vsub.f32 0.0, %v548
        %v613 = vsub.f32 0.0, %v553
        %v614 = vsub.f32 0.0, %v558
        %v615 = vsub.f32 0.0, %v563
        %v616 = vsub.f32 0.0, %v568
        %v617 = vsub.f32 0.0, %v573
        %v618 = vsub.f32 0.0, %v578
        %v619 = vsub.f32 0.0, %v583
        %v620 = vsub.f32 0.0, %v588
        %v621 = vsub.f32 0.0, %v593
        %v622 = vsub.f32 0.0, %v598
        %v623 = vmul.f32 %v601, 1.442695
        %v624 = vpow.pop %v623
        %v625 = vmul.f32 %v602, 1.442695
        %v626 = vpow.pop %v625
        %v627 = vmul.f32 %v603, 1.442695
        %v628 = vpow.pop %v627
        %v629 = vmul.f32 %v604, 1.442695
        %v630 = vpow.pop %v629
        %v631 = vmul.f32 %v605, 1.442695
        %v632 = vpow.pop %v631
        %v633 = vmul.f32 %v606, 1.442695
        %v634 = vpow.pop %v633
        %v635 = vmul.f32 %v607, 1.442695
        %v636 = vpow.pop %v635
        %v637 = vmul.f32 %v608, 1.442695
        %v638 = vpow.pop %v637
        %v639 = vmul.f32 %v609, 1.442695
        %v640 = vpow.pop %v639
        %v641 = vmul.f32 %v610, 1.442695
        %v642 = vpow.pop %v641
        %v643 = vmul.f32 %v611, 1.442695
        %v644 = vpow.pop %v643
        %v645 = vmul.f32 %v612, 1.442695
        %v646 = vpow.pop %v645
        %v647 = vmul.f32 %v613, 1.442695
        %v648 = vpow.pop %v647
        %v649 = vmul.f32 %v614, 1.442695
        %v650 = vpow.pop %v649
        %v651 = vmul.f32 %v615, 1.442695
        %v652 = vpow.pop %v651
        %v653 = vmul.f32 %v616, 1.442695
        %v654 = vpow.pop %v653
        %v655 = vmul.f32 %v617, 1.442695
        %v656 = vpow.pop %v655
        %v657 = vmul.f32 %v618, 1.442695
        %v658 = vpow.pop %v657
        %v659 = vmul.f32 %v619, 1.442695
        %v660 = vpow.pop %v659
        %v661 = vmul.f32 %v620, 1.442695
        %v662 = vpow.pop %v661
        %v663 = vmul.f32 %v621, 1.442695
        %v664 = vpow.pop %v663
        %v665 = vmul.f32 %v622, 1.442695
        %v666 = vpow.pop %v665
        %v667 = vadd.f32 %v624, 1.0
        %v668 = vadd.f32 %v626, 1.0
        %v669 = vadd.f32 %v628, 1.0
        %v670 = vadd.f32 %v630, 1.0
        %v671 = vadd.f32 %v632, 1.0
        %v672 = vadd.f32 %v634, 1.0
        %v673 = vadd.f32 %v636, 1.0
        %v674 = vadd.f32 %v638, 1.0
        %v675 = vadd.f32 %v640, 1.0
        %v676 = vadd.f32 %v642, 1.0
        %v677 = vadd.f32 %v644, 1.0
        %v678 = vadd.f32 %v646, 1.0
        %v679 = vadd.f32 %v648, 1.0
        %v680 = vadd.f32 %v650, 1.0
        %v681 = vadd.f32 %v652, 1.0
        %v682 = vadd.f32 %v654, 1.0
        %v683 = vadd.f32 %v656, 1.0
        %v684 = vadd.f32 %v658, 1.0
        %v685 = vadd.f32 %v660, 1.0
        %v686 = vadd.f32 %v662, 1.0
        %v687 = vadd.f32 %v664, 1.0
        %v688 = vadd.f32 %v666, 1.0
        %v689 = vrcp.pop %v667
        %v690 = vrcp.pop %v668
        %v691 = vrcp.pop %v669
        %v692 = vrcp.pop %v670
        %v693 = vrcp.pop %v671
        %v694 = vrcp.pop %v672
        %v695 = vrcp.pop %v673
        %v696 = vrcp.pop %v674
        %v697 = vrcp.pop %v675
        %v698 = vrcp.pop %v676
        %v699 = vrcp.pop %v677
        %v700 = vrcp.pop %v678
        %v701 = vrcp.pop %v679
        %v702 = vrcp.pop %v680
        %v703 = vrcp.pop %v681
        %v704 = vrcp.pop %v682
        %v705 = vrcp.pop %v683
        %v706 = vrcp.pop %v684
        %v707 = vrcp.pop %v685
        %v708 = vrcp.pop %v686
        %v709 = vrcp.pop %v687
        %v710 = vrcp.pop %v688
        %v711 = vmul.f32 %v493, %v689
        %v712 = vmul.f32 %v498, %v690
        %v713 = vmul.f32 %v503, %v691
        %v714 = vmul.f32 %v508, %v692
        %v715 = vmul.f32 %v513, %v693
        %v716 = vmul.f32 %v518, %v694
        %v717 = vmul.f32 %v523, %v695
        %v718 = vmul.f32 %v528, %v696
        %v719 = vmul.f32 %v533, %v697
        %v720 = vmul.f32 %v538, %v698
        %v721 = vmul.f32 %v543, %v699
        %v722 = vmul.f32 %v548, %v700
        %v723 = vmul.f32 %v553, %v701
        %v724 = vmul.f32 %v558, %v702
        %v725 = vmul.f32 %v563, %v703
        %v726 = vmul.f32 %v568, %v704
        %v727 = vmul.f32 %v573, %v705
        %v728 = vmul.f32 %v578, %v706
        %v729 = vmul.f32 %v583, %v707
        %v730 = vmul.f32 %v588, %v708
        %v731 = vmul.f32 %v593, %v709
        %v732 = vmul.f32 %v598, %v710
        %v733 = vpack.c.bf16 %v712, %v711
        %v734 = vpack.c.bf16 %v714, %v713
        %v735 = vpack.c.bf16 %v716, %v715
        %v736 = vpack.c.bf16 %v718, %v717
        %v737 = vpack.c.bf16 %v720, %v719
        %v738 = vpack.c.bf16 %v722, %v721
        %v739 = vpack.c.bf16 %v724, %v723
        %v740 = vpack.c.bf16 %v726, %v725
        %v741 = vpack.c.bf16 %v728, %v727
        %v742 = vpack.c.bf16 %v730, %v729
        %v743 = vpack.c.bf16 %v732, %v731
        %v744 = vld [vmem:[#allocation8] sm:$0xf]
        %v745 = vld [vmem:[#allocation8 + $0x4] sm:$0xf]
        %v746 = vld [vmem:[#allocation8 + $0x8] sm:$0xf]
        %v747 = vld [vmem:[#allocation8 + $0xc] sm:$0xf]
        %v748 = vld [vmem:[#allocation8 + $0x10] sm:$0xf]
        %v749 = vld [vmem:[#allocation8 + $0x14] sm:$0xf]
        %v750 = vld [vmem:[#allocation8 + $0x18] sm:$0xf]
        %v751 = vld [vmem:[#allocation8 + $0x1c] sm:$0xf]
        %v752 = vld [vmem:[#allocation8 + $0x20] sm:$0xf]
        %v753 = vld [vmem:[#allocation8 + $0x24] sm:$0xf]
        %v754 = vld [vmem:[#allocation8 + $0x28] sm:$0xf]
        %v755 = vld [vmem:[#allocation8 + $0x2c] sm:$0xf]
        %v756 = vld [vmem:[#allocation8 + $0x30] sm:$0xf]
        %v757 = vld [vmem:[#allocation8 + $0x34] sm:$0xf]
        %v758 = vld [vmem:[#allocation8 + $0x38] sm:$0xf]
        %v759 = vld [vmem:[#allocation8 + $0x3c] sm:$0xf]
        %v760 = vld [vmem:[#allocation10] sm:$0x1]
        %v762 = vlaneseq
        %v763 = vshrl.u32 %v762, 7
        %v764 = vsub.s32 0, %v763
        %v765 = vrot.slane %v760, %v764
        %v783 = vunpack.c.l.b16 %v744
        %v784 = vunpack.c.l.b16 %v745
        %v785 = vunpack.c.l.b16 %v746
        %v786 = vunpack.c.l.b16 %v747
        %v787 = vunpack.c.l.b16 %v748
        %v788 = vunpack.c.l.b16 %v749
        %v789 = vunpack.c.l.b16 %v750
        %v790 = vunpack.c.l.b16 %v751
        %v791 = vunpack.c.l.b16 %v752
        %v792 = vunpack.c.l.b16 %v753
        %v793 = vunpack.c.l.b16 %v754
        %v794 = vunpack.c.l.b16 %v755
        %v795 = vunpack.c.l.b16 %v756
        %v796 = vunpack.c.l.b16 %v757
        %v797 = vunpack.c.l.b16 %v758
        %v798 = vunpack.c.l.b16 %v759
        %v799 = vpack.c.b16 %v784, %v783
        %v800 = vpack.c.b16 %v786, %v785
        %v801 = vpack.c.b16 %v788, %v787
        %v802 = vpack.c.b16 %v790, %v789
        %v803 = vpack.c.b16 %v792, %v791
        %v804 = vpack.c.b16 %v794, %v793
        %v805 = vpack.c.b16 %v796, %v795
        %v806 = vpack.c.b16 %v798, %v797
        %815 = vmatprep.subr.bf16.mxu0 0
        %816 = vmatpush1.bf16.msra.mxu0 %v799
        %817 = vmatprep.subr.bf16.mxu0 0
        %818 = vmatpush1.bf16.msra.mxu0 %v800
        %819 = vmatprep.subr.bf16.mxu0 0
        %820 = vmatpush1.bf16.msra.mxu0 %v801
        %821 = vmatprep.subr.bf16.mxu0 0
        %822 = vmatpush1.bf16.msra.mxu0 %v802
        %823 = vmatprep.subr.bf16.mxu0 0
        %824 = vmatpush1.bf16.msra.mxu0 %v803
        %825 = vmatprep.subr.bf16.mxu0 0
        %826 = vmatpush1.bf16.msra.mxu0 %v804
        %827 = vmatprep.subr.bf16.mxu0 0
        %828 = vmatpush1.bf16.msra.mxu0 %v805
        %829 = vmatprep.subr.bf16.mxu0 0
        %830 = vmatpush1.bf16.msra.mxu0 %v806
        %831 = vmatprep.subr.bf16.mxu0 0
        %832 = vmatpush1.bf16.msra.mxu0 0
        %833 = vmatprep.subr.bf16.mxu0 0
        %834 = vmatpush1.bf16.msra.mxu0 0
        %835 = vmatprep.subr.bf16.mxu0 0
        %836 = vmatpush1.bf16.msra.mxu0 0
        %837 = vmatprep.subr.bf16.mxu0 0
        %838 = vmatpush1.bf16.msra.mxu0 0
        %839 = vmatprep.subr.bf16.mxu0 0
        %840 = vmatpush1.bf16.msra.mxu0 0
        %841 = vmatprep.subr.bf16.mxu0 0
        %842 = vmatpush1.bf16.msra.mxu0 0
        %843 = vmatprep.subr.bf16.mxu0 0
        %844 = vmatpush1.bf16.msra.mxu0 0
        %845 = vmatprep.subr.bf16.mxu0 0
        %846 = vmatpush1.bf16.msra.mxu0 0
        %847 = vmatprep.mubr.bf16.mxu0 0
        %848 = vmatmul.mubr.bf16.gmra.mrb[0].mxu0 %v733
        %v849 = vpop.f32.mrb[0].mxu0
        %v850 = vadd.f32 %v765, %v849
        %v851 = vpop.f32.mrb[0].mxu0
        %v852 = vpop.f32.mrb[0].mxu0
        %v853 = vadd.f32 %v765, %v852
        %v854 = vpop.f32.mrb[0].mxu0
        %855 = vmatprep.mubr.bf16.mxu0 0
        %856 = vmatmul.mubr.bf16.gmra.mrb[0].mxu0 %v734
        %v857 = vpop.f32.mrb[0].mxu0
        %v858 = vadd.f32 %v765, %v857
        %v859 = vpop.f32.mrb[0].mxu0
        %v860 = vpop.f32.mrb[0].mxu0
        %v861 = vadd.f32 %v765, %v860
        %v862 = vpop.f32.mrb[0].mxu0
        %863 = vmatprep.mubr.bf16.mxu0 0
        %864 = vmatmul.mubr.bf16.gmra.mrb[0].mxu0 %v735
        %v865 = vpop.f32.mrb[0].mxu0
        %v866 = vadd.f32 %v765, %v865
        %v867 = vpop.f32.mrb[0].mxu0
        %v868 = vpop.f32.mrb[0].mxu0
        %v869 = vadd.f32 %v765, %v868
        %v870 = vpop.f32.mrb[0].mxu0
        %871 = vmatprep.mubr.bf16.mxu0 0
        %872 = vmatmul.mubr.bf16.gmra.mrb[0].mxu0 %v736
        %v873 = vpop.f32.mrb[0].mxu0
        %v874 = vadd.f32 %v765, %v873
        %v875 = vpop.f32.mrb[0].mxu0
        %v876 = vpop.f32.mrb[0].mxu0
        %v877 = vadd.f32 %v765, %v876
        %v878 = vpop.f32.mrb[0].mxu0
        %879 = vmatprep.mubr.bf16.mxu0 0
        %880 = vmatmul.mubr.bf16.gmra.mrb[0].mxu0 %v737
        %v881 = vpop.f32.mrb[0].mxu0
        %v882 = vadd.f32 %v765, %v881
        %v883 = vpop.f32.mrb[0].mxu0
        %v884 = vpop.f32.mrb[0].mxu0
        %v885 = vadd.f32 %v765, %v884
        %v886 = vpop.f32.mrb[0].mxu0
        %887 = vmatprep.mubr.bf16.mxu0 0
        %888 = vmatmul.mubr.bf16.gmra.mrb[0].mxu0 %v738
        %v889 = vpop.f32.mrb[0].mxu0
        %v890 = vadd.f32 %v765, %v889
        %v891 = vpop.f32.mrb[0].mxu0
        %v892 = vpop.f32.mrb[0].mxu0
        %v893 = vadd.f32 %v765, %v892
        %v894 = vpop.f32.mrb[0].mxu0
        %895 = vmatprep.mubr.bf16.mxu0 0
        %896 = vmatmul.mubr.bf16.gmra.mrb[0].mxu0 %v739
        %v897 = vpop.f32.mrb[0].mxu0
        %v898 = vadd.f32 %v765, %v897
        %v899 = vpop.f32.mrb[0].mxu0
        %v900 = vpop.f32.mrb[0].mxu0
        %v901 = vadd.f32 %v765, %v900
        %v902 = vpop.f32.mrb[0].mxu0
        %903 = vmatprep.mubr.bf16.mxu0 0
        %904 = vmatmul.mubr.bf16.gmra.mrb[0].mxu0 %v740
        %v905 = vpop.f32.mrb[0].mxu0
        %v906 = vadd.f32 %v765, %v905
        %v907 = vpop.f32.mrb[0].mxu0
        %v908 = vpop.f32.mrb[0].mxu0
        %v909 = vadd.f32 %v765, %v908
        %v910 = vpop.f32.mrb[0].mxu0
        %911 = vmatprep.mubr.bf16.mxu0 0
        %912 = vmatmul.mubr.bf16.gmra.mrb[0].mxu0 %v741
        %v913 = vpop.f32.mrb[0].mxu0
        %v914 = vadd.f32 %v765, %v913
        %v915 = vpop.f32.mrb[0].mxu0
        %v916 = vpop.f32.mrb[0].mxu0
        %v917 = vadd.f32 %v765, %v916
        %v918 = vpop.f32.mrb[0].mxu0
        %919 = vmatprep.mubr.bf16.mxu0 0
        %920 = vmatmul.mubr.bf16.gmra.mrb[0].mxu0 %v742
        %v921 = vpop.f32.mrb[0].mxu0
        %v922 = vadd.f32 %v765, %v921
        %v923 = vpop.f32.mrb[0].mxu0
        %v924 = vpop.f32.mrb[0].mxu0
        %v925 = vadd.f32 %v765, %v924
        %v926 = vpop.f32.mrb[0].mxu0
        %927 = vmatprep.mubr.bf16.mxu0 0
        %928 = vmatmul.mubr.bf16.gmra.mrb[0].mxu0 %v743
        %v929 = vpop.f32.mrb[0].mxu0
        %v930 = vadd.f32 %v765, %v929
        %v931 = vpop.f32.mrb[0].mxu0
        %v932 = vpop.f32.mrb[0].mxu0
        %v933 = vadd.f32 %v765, %v932
        %v934 = vpop.f32.mrb[0].mxu0
        %935 = vdwg.mxu0
        %936 = vst [vmem:[%s324] sm:$0xff] %v850
        %937 = vst [vmem:[%s324 + $0x8] sm:$0xff] %v853
        %938 = vst [vmem:[%s324 + $0x10] sm:$0xff] %v858
        %939 = vst [vmem:[%s324 + $0x18] sm:$0xff] %v861
        %940 = vst [vmem:[%s324 + $0x20] sm:$0xff] %v866
        %941 = vst [vmem:[%s324 + $0x28] sm:$0xff] %v869
        %942 = vst [vmem:[%s324 + $0x30] sm:$0xff] %v874
        %943 = vst [vmem:[%s324 + $0x38] sm:$0xff] %v877
        %944 = vst [vmem:[%s324 + $0x40] sm:$0xff] %v882
        %945 = vst [vmem:[%s324 + $0x48] sm:$0xff] %v885
        %946 = vst [vmem:[%s324 + $0x50] sm:$0xff] %v890
        %947 = vst [vmem:[%s324 + $0x58] sm:$0xff] %v893
        %948 = vst [vmem:[%s324 + $0x60] sm:$0xff] %v898
        %949 = vst [vmem:[%s324 + $0x68] sm:$0xff] %v901
        %950 = vst [vmem:[%s324 + $0x70] sm:$0xff] %v906
        %951 = vst [vmem:[%s324 + $0x78] sm:$0xff] %v909
        %952 = vst [vmem:[%s324 + $0x80] sm:$0xff] %v914
        %953 = vst [vmem:[%s324 + $0x88] sm:$0xff] %v917
        %954 = vst [vmem:[%s324 + $0x90] sm:$0xff] %v922
        %955 = vst [vmem:[%s324 + $0x98] sm:$0xff] %v925
        %956 = vst [vmem:[%s324 + $0xa0] sm:$0xff] %v930
        %957 = vst [vmem:[%s324 + $0xa8] sm:$0xff] %v933
        %s958 = sand.u32 %s166, 1
        %s959 = scalar_lea.sflag [#allocation4], %s958
        %s960 = sand.u32 %s166, 1
        %s961 = smul.addr %s960, 176
        %s962 = scalar_lea.vmem [#allocation11], %s961
        // Predicated region
        $region61: #{tpu_custom_call.1} parent=39 // pred_check
          %p963 = pneg %p176
        $region62: #{tpu_custom_call.1} parent=39 // pred_check_branch
          %965 = sbr.rel (%p963) target = $region64
        $region63: #{tpu_custom_call.1} parent=39 // pred_region
          %s966 = smul.u32 22, %s28
          %s968 = ssub.s32 2816, 2816
          %969 = vsyncadd %s959, %s968
          %s970 = sadd.s32 %s29, %s966
          %s971 = smul.addr %s970, 128
          %s972 = scalar_lea.hbm %s5, %s971
          %s973 = sshll.u32 %s962, 4
          %s974 = int_to_ptr.vmem [resolvable:$true] %s973
          %979 = dma.vmem_to_hbm [thread:$0]  %s974, 2816, %s972, %s959, 128, 128, 8
        $region64: #{tpu_custom_call.1} parent=39 // pred_fallthru
          _
      $region40: #{tpu_custom_call.1} parent=5 // pred_fallthru
        _
      %p980 = scmp.le.s32.totalorder 2, %s19
      // Predicated region
      $region65: #{tpu_custom_call.1} parent=5 // pred_check
        %p981 = pneg %p980
      $region66: #{tpu_custom_call.1} parent=5 // pred_check_branch
        %983 = sbr.rel (%p981) target = $region68
      $region67: #{tpu_custom_call.1} parent=5 // pred_region
        %s984 = ssub.s32 %s19, 2
        // Predicated region
        $region69: #{tpu_custom_call.1} parent=67 // pred_check
          %p985 = pneg %p182
        $region70: #{tpu_custom_call.1} parent=67 // pred_check_branch
          %987 = sbr.rel (%p985) target = $region72
        $region71: #{tpu_custom_call.1} parent=67 // pred_region
          %s988 = sand.u32 %s167, 1
          %s989 = scalar_lea.sflag [#allocation4], %s988
          %s990 = sand.u32 %s167, 1
          %s991 = smul.addr %s990, 176
          %s992 = scalar_lea.vmem [#allocation11], %s991
          %993 = dma.done %s989, 2816
        $region72: #{tpu_custom_call.1} parent=67 // pred_fallthru
          _
      $region68: #{tpu_custom_call.1} parent=5 // pred_fallthru
        _
    $region6: #{tpu_custom_call.1} parent=1 // loop_footer
      %s23 = sadd.s32 1, %s19
    $region7: #{tpu_custom_call.1} parent=1 // loop_footer_branch
      %18 = sbr.rel target = $region3
    $region8: #{tpu_custom_call.1} parent=1 // loop_exit
      _
    %994 = vsyncpa [#allocation3], 1
    %s995 = scalar_lea.sflag [#allocation3], 1
    %996 = vsyncpa %s995, 1
    %997 = vsyncpa [#allocation6], 1
    %998 = vsyncpa [#allocation9], 1
    %999 = vsyncpa [#allocation4], 1
    %s1000 = scalar_lea.sflag [#allocation4], 1
    %1001 = vsyncpa %s1000, 1

</llo_original>
